<compile_context>
chip_gen: v7x
topology: tpu7x:2x2x1
jax: 0.10.0
libtpu: 0.0.40
codegen_flags: <defaults>
</compile_context>

<pallas_src>
import jax
import jax.numpy as jnp
from jax.experimental import pallas as pl
from jax.experimental.pallas import tpu as pltpu

NEG_INF = -1e30  # finite "-inf" used for vocab padding (avoids inf arithmetic)


def skipgram_kernel(idx_ref,    # SMEM (1,) int32  -- scalar-prefetched word index
                    emb_hbm,    # ANY  (V, D)      -- embedding table, stays in HBM
                    wt_ref,     # VMEM (D, TV)     -- weight tile (pre-transposed)
                    b_ref,      # VMEM (1, TV)     -- bias tile (padded with NEG_INF)
                    out_ref,    # VMEM (NT, 1, TV) -- resident raw-logits / log-probs
                    emb_row,    # VMEM (1, D)      -- gathered embedding row (scratch)
                    m_ref,      # VMEM (1, 1)      -- running max (scratch)
                    l_ref,      # VMEM (1, 1)      -- running sum-of-exp (scratch)
                    dma_sem):   # DMA semaphore for the row gather
    j = pl.program_id(0)
    num_tiles = pl.num_programs(0)
    d = wt_ref.shape[0]

    @pl.when(j == 0)
    def _init():
        # Gather exactly one (1, D) embedding row from HBM (not the whole table).
        row = idx_ref[0]
        cp = pltpu.make_async_copy(emb_hbm.at[pl.ds(row, 1), :], emb_row, dma_sem)
        cp.start()
        cp.wait()
        m_ref[...] = jnp.full_like(m_ref, -jnp.inf)
        l_ref[...] = jnp.zeros_like(l_ref)

    # Linear tile: logits = emb_row @ W_tile + b_tile, as D broadcast-FMAs (VPU).
    logits = b_ref[...].astype(jnp.float32)                         # (1, TV)
    for dd in range(d):                                             # D small, static unroll
        e_d = emb_row[:, dd:dd + 1].astype(jnp.float32)             # (1, 1)
        logits = logits + e_d * wt_ref[dd:dd + 1, :].astype(jnp.float32)

    # Online logsumexp across vocab tiles (running max m, running sum l).
    m_prev = m_ref[...]
    m_new = jnp.maximum(m_prev, jnp.max(logits, axis=1, keepdims=True))
    l_ref[...] = (l_ref[...] * jnp.exp(m_prev - m_new)
                  + jnp.sum(jnp.exp(logits - m_new), axis=1, keepdims=True))
    m_ref[...] = m_new

    # Stash raw logits for this tile in the resident output block.
    out_ref[j] = logits

    @pl.when(j == num_tiles - 1)
    def _finalize():
        lse = m_ref[...] + jnp.log(l_ref[...])        # (1, 1)
        out_ref[...] = out_ref[...] - lse             # log_probs = logits - lse


def prepare_linear_params(linear_weight, linear_bias, *, tile_v=512):
    """One-time layout prep (call at parameter-init time, NOT per forward):
    transpose the PyTorch-layout (V, D) Linear weight to (D, V) and pad the
    vocab axis up to a multiple of tile_v (multiple of 128 -> lane-dense)."""
    V, D = linear_weight.shape
    tile_v = max(128, (int(tile_v) // 128) * 128)
    v_pad = ((V + tile_v - 1) // tile_v) * tile_v
    wt = jnp.transpose(linear_weight).astype(jnp.float32)           # (D, V)
    wt = jnp.pad(wt, ((0, 0), (0, v_pad - V)))                      # pad cols with 0
    bias = jnp.pad(linear_bias.astype(jnp.float32), (0, v_pad - V),
                   constant_values=NEG_INF)                         # pad with -1e30
    return wt, bias.reshape(1, v_pad), tile_v


def skipgram_forward(idx, embedding_table, wt_dv, bias_row, *, tile_v):
    """idx: (1,) int32; embedding_table: (V, D); wt_dv: (D, V_pad) pre-transposed/
    padded weight; bias_row: (1, V_pad) padded bias. Returns (1, V) log-probs."""
    V, D = embedding_table.shape
    Dw, v_pad = wt_dv.shape
    assert Dw == D and bias_row.shape == (1, v_pad) and v_pad % tile_v == 0
    num_tiles = v_pad // tile_v

    # Defensive clamp: an OOB gather from HBM would silently read garbage.
    idx = jnp.clip(idx.astype(jnp.int32), 0, V - 1)

    grid_spec = pltpu.PrefetchScalarGridSpec(
        num_scalar_prefetch=1,
        grid=(num_tiles,),
        in_specs=[
            pl.BlockSpec(memory_space=pl.ANY),                        # embedding table (HBM)
            pl.BlockSpec((D, tile_v), lambda j, idx_ref: (0, j)),     # weight tile (streamed)
            pl.BlockSpec((1, tile_v), lambda j, idx_ref: (0, j)),     # bias tile
        ],
        out_specs=pl.BlockSpec((num_tiles, 1, tile_v),
                               lambda j, idx_ref: (0, 0, 0)),         # resident logits block
        scratch_shapes=[
            pltpu.VMEM((1, D), embedding_table.dtype),                # gathered embedding row
            pltpu.VMEM((1, 1), jnp.float32),                          # running max m
            pltpu.VMEM((1, 1), jnp.float32),                          # running sum l
            pltpu.SemaphoreType.DMA(()),                              # row-gather DMA sem
        ],
    )

    out = pl.pallas_call(
        skipgram_kernel,
        out_shape=jax.ShapeDtypeStruct((num_tiles, 1, tile_v), jnp.float32),
        grid_spec=grid_spec,
        compiler_params=pltpu.CompilerParams(
            dimension_semantics=("arbitrary",)),   # vocab axis carries online reduction
    )(idx, embedding_table, wt_dv, bias_row)

    # (NT, 1, TV) -> (1, V_pad) -> slice off vocab padding. Trivial glue.
    return out.reshape(1, v_pad)[:, :V]


if __name__ == "__main__":
    # Small, deterministic synthetic setup consistent with the module:
    vocab_size = 1000          # small word-level vocab
    embedding_dim = 10         # as in the PyTorch script
    tile_v = 256               # lane-dense vocab tile (multiple of 128)

    key = jax.random.PRNGKey(0)
    k_emb, k_w, k_b, k_idx = jax.random.split(key, 4)

    # nn.Embedding init ~ N(0,1); nn.Linear init ~ U(-1/sqrt(in), 1/sqrt(in))
    embedding_table = jax.random.normal(k_emb, (vocab_size, embedding_dim),
                                        dtype=jnp.float32)
    bound = 1.0 / float(embedding_dim) ** 0.5
    linear_weight = jax.random.uniform(k_w, (vocab_size, embedding_dim),
                                       minval=-bound, maxval=bound,
                                       dtype=jnp.float32)
    linear_bias = jax.random.uniform(k_b, (vocab_size,),
                                     minval=-bound, maxval=bound,
                                     dtype=jnp.float32)

    # One-time layout prep (transpose + pad) -- hoisted out of the per-call path.
    wt_dv, bias_row, tile_v = prepare_linear_params(linear_weight, linear_bias,
                                                    tile_v=tile_v)

    # Single input word index (skip-gram center word).
    idx = jax.random.randint(k_idx, (1,), 0, vocab_size, dtype=jnp.int32)

    fwd = jax.jit(skipgram_forward, static_argnames=("tile_v",))
    log_probs = jax.block_until_ready(
        fwd(idx, embedding_table, wt_dv, bias_row, tile_v=tile_v))

    # Pure-JAX reference for correctness.
    embeds_ref = embedding_table[idx[0]].reshape(1, -1)
    logits_ref = embeds_ref @ linear_weight.T + linear_bias
    ref = jax.nn.log_softmax(logits_ref, axis=1)

    assert log_probs.shape == (1, vocab_size)
    assert jnp.allclose(log_probs, ref, atol=1e-4, rtol=1e-4), \
        float(jnp.max(jnp.abs(log_probs - ref)))
    print("KERNEL_OK")
</pallas_src>

<mosaic_0001>
module attributes {stable_mosaic.version = 11 : i64} {
  func.func @skipgram_kernel(%arg0: i32, %arg1: memref<1xi32, #tpu.memory_space<smem>>, %arg2: memref<1000x10xf32, #tpu.memory_space<any>>, %arg3: memref<10x256xf32, #tpu.memory_space<vmem>>, %arg4: memref<1x256xf32, #tpu.memory_space<vmem>>, %arg5: memref<4x1x256xf32, #tpu.memory_space<vmem>>, %arg6: memref<1x10xf32, #tpu.memory_space<vmem>>, %arg7: memref<1x1xf32, #tpu.memory_space<vmem>>, %arg8: memref<1x1xf32, #tpu.memory_space<vmem>>, %arg9: memref<!tpu.dma_semaphore, #tpu.memory_space<semaphore_mem>>) attributes {dimension_semantics = [#tpu.dimension_semantics<arbitrary>], iteration_bounds = array<i64: 4>, scalar_prefetch = 1 : i64, scratch_operands = 4 : i64, tpu.core_type = #tpu.core_type<tc>, window_params = [{}, {transform_indices = @transform_1, window_bounds = array<i64: 10, 256>}, {transform_indices = @transform_2, window_bounds = array<i64: 1, 256>}, {pipeline_mode = #tpu.pipeline_mode<synchronous>, transform_indices = @transform_3, window_bounds = array<i64: 4, 1, 256>}]} {
    %c0_i32 = arith.constant 0 : i32
    %0 = arith.cmpi eq, %arg0, %c0_i32 : i32
    %1 = arith.extui %0 : i1 to i32
    %c0_i32_0 = arith.constant 0 : i32
    %2 = arith.cmpi ne, %1, %c0_i32_0 : i32
    scf.if %2 {
      %c0_45 = arith.constant 0 : index
      %77 = memref.load %arg1[%c0_45] : memref<1xi32, #tpu.memory_space<smem>>
      %c0_i32_46 = arith.constant 0 : i32
      %78 = tpu.memref_slice %arg2[%77, %c0_i32_46] : memref<1000x10xf32, #tpu.memory_space<any>> -> memref<1x10xf32, #tpu.memory_space<any>>
      tpu.enqueue_dma source(%78 : memref<1x10xf32, #tpu.memory_space<any>>) target(%arg6 : memref<1x10xf32, #tpu.memory_space<vmem>>) target_semaphore(%arg9 : memref<!tpu.dma_semaphore, #tpu.memory_space<semaphore_mem>>)
      %c0_i32_47 = arith.constant 0 : i32
      %79 = tpu.memref_slice %arg2[%77, %c0_i32_47] : memref<1000x10xf32, #tpu.memory_space<any>> -> memref<1x10xf32, #tpu.memory_space<any>>
      tpu.wait_dma2 semaphore(%arg9 : memref<!tpu.dma_semaphore, #tpu.memory_space<semaphore_mem>>) src(%79 : memref<1x10xf32, #tpu.memory_space<any>>) dst(%arg6 : memref<1x10xf32, #tpu.memory_space<vmem>>)
      %cst_48 = arith.constant 0xFF800000 : f32
      %80 = vector.broadcast %cst_48 : f32 to vector<1x1xf32>
      %c0_49 = arith.constant 0 : index
      %c0_50 = arith.constant 0 : index
      %81 = vector.load %arg7[%c0_49, %c0_50] : memref<1x1xf32, #tpu.memory_space<vmem>>, vector<1x1xf32>
      tpu.vector_store %arg7[%c0_49, %c0_50], %80 {strides = array<i32>} : memref<1x1xf32, #tpu.memory_space<vmem>>, vector<1x1xf32>,
      %cst_51 = arith.constant 0.000000e+00 : f32
      %82 = vector.broadcast %cst_51 : f32 to vector<1x1xf32>
      %c0_52 = arith.constant 0 : index
      %c0_53 = arith.constant 0 : index
      %83 = vector.load %arg8[%c0_52, %c0_53] : memref<1x1xf32, #tpu.memory_space<vmem>>, vector<1x1xf32>
      tpu.vector_store %arg8[%c0_52, %c0_53], %82 {strides = array<i32>} : memref<1x1xf32, #tpu.memory_space<vmem>>, vector<1x1xf32>,
    } else {
    }
    %c0 = arith.constant 0 : index
    %c0_1 = arith.constant 0 : index
    %3 = vector.load %arg4[%c0, %c0_1] : memref<1x256xf32, #tpu.memory_space<vmem>>, vector<1x256xf32>
    %c0_2 = arith.constant 0 : index
    %c0_3 = arith.constant 0 : index
    %4 = vector.load %arg6[%c0_2, %c0_3] : memref<1x10xf32, #tpu.memory_space<vmem>>, vector<1x1xf32>
    %c0_4 = arith.constant 0 : index
    %c0_5 = arith.constant 0 : index
    %5 = vector.load %arg3[%c0_4, %c0_5] : memref<10x256xf32, #tpu.memory_space<vmem>>, vector<1x256xf32>
    %6 = vector.broadcast %4 : vector<1x1xf32> to vector<1x256xf32>
    %7 = arith.mulf %6, %5 : vector<1x256xf32>
    %8 = arith.addf %3, %7 : vector<1x256xf32>
    %c0_6 = arith.constant 0 : index
    %c1 = arith.constant 1 : index
    %9 = vector.load %arg6[%c0_6, %c1] : memref<1x10xf32, #tpu.memory_space<vmem>>, vector<1x1xf32>
    %c1_7 = arith.constant 1 : index
    %c0_8 = arith.constant 0 : index
    %10 = vector.load %arg3[%c1_7, %c0_8] : memref<10x256xf32, #tpu.memory_space<vmem>>, vector<1x256xf32>
    %11 = vector.broadcast %9 : vector<1x1xf32> to vector<1x256xf32>
    %12 = arith.mulf %11, %10 : vector<1x256xf32>
    %13 = arith.addf %8, %12 : vector<1x256xf32>
    %c0_9 = arith.constant 0 : index
    %c2 = arith.constant 2 : index
    %14 = vector.load %arg6[%c0_9, %c2] : memref<1x10xf32, #tpu.memory_space<vmem>>, vector<1x1xf32>
    %c2_10 = arith.constant 2 : index
    %c0_11 = arith.constant 0 : index
    %15 = vector.load %arg3[%c2_10, %c0_11] : memref<10x256xf32, #tpu.memory_space<vmem>>, vector<1x256xf32>
    %16 = vector.broadcast %14 : vector<1x1xf32> to vector<1x256xf32>
    %17 = arith.mulf %16, %15 : vector<1x256xf32>
    %18 = arith.addf %13, %17 : vector<1x256xf32>
    %c0_12 = arith.constant 0 : index
    %c3 = arith.constant 3 : index
    %19 = vector.load %arg6[%c0_12, %c3] : memref<1x10xf32, #tpu.memory_space<vmem>>, vector<1x1xf32>
    %c3_13 = arith.constant 3 : index
    %c0_14 = arith.constant 0 : index
    %20 = vector.load %arg3[%c3_13, %c0_14] : memref<10x256xf32, #tpu.memory_space<vmem>>, vector<1x256xf32>
    %21 = vector.broadcast %19 : vector<1x1xf32> to vector<1x256xf32>
    %22 = arith.mulf %21, %20 : vector<1x256xf32>
    %23 = arith.addf %18, %22 : vector<1x256xf32>
    %c0_15 = arith.constant 0 : index
    %c4 = arith.constant 4 : index
    %24 = vector.load %arg6[%c0_15, %c4] : memref<1x10xf32, #tpu.memory_space<vmem>>, vector<1x1xf32>
    %c4_16 = arith.constant 4 : index
    %c0_17 = arith.constant 0 : index
    %25 = vector.load %arg3[%c4_16, %c0_17] : memref<10x256xf32, #tpu.memory_space<vmem>>, vector<1x256xf32>
    %26 = vector.broadcast %24 : vector<1x1xf32> to vector<1x256xf32>
    %27 = arith.mulf %26, %25 : vector<1x256xf32>
    %28 = arith.addf %23, %27 : vector<1x256xf32>
    %c0_18 = arith.constant 0 : index
    %c5 = arith.constant 5 : index
    %29 = vector.load %arg6[%c0_18, %c5] : memref<1x10xf32, #tpu.memory_space<vmem>>, vector<1x1xf32>
    %c5_19 = arith.constant 5 : index
    %c0_20 = arith.constant 0 : index
    %30 = vector.load %arg3[%c5_19, %c0_20] : memref<10x256xf32, #tpu.memory_space<vmem>>, vector<1x256xf32>
    %31 = vector.broadcast %29 : vector<1x1xf32> to vector<1x256xf32>
    %32 = arith.mulf %31, %30 : vector<1x256xf32>
    %33 = arith.addf %28, %32 : vector<1x256xf32>
    %c0_21 = arith.constant 0 : index
    %c6 = arith.constant 6 : index
    %34 = vector.load %arg6[%c0_21, %c6] : memref<1x10xf32, #tpu.memory_space<vmem>>, vector<1x1xf32>
    %c6_22 = arith.constant 6 : index
    %c0_23 = arith.constant 0 : index
    %35 = vector.load %arg3[%c6_22, %c0_23] : memref<10x256xf32, #tpu.memory_space<vmem>>, vector<1x256xf32>
    %36 = vector.broadcast %34 : vector<1x1xf32> to vector<1x256xf32>
    %37 = arith.mulf %36, %35 : vector<1x256xf32>
    %38 = arith.addf %33, %37 : vector<1x256xf32>
    %c0_24 = arith.constant 0 : index
    %c7 = arith.constant 7 : index
    %39 = vector.load %arg6[%c0_24, %c7] : memref<1x10xf32, #tpu.memory_space<vmem>>, vector<1x1xf32>
    %c7_25 = arith.constant 7 : index
    %c0_26 = arith.constant 0 : index
    %40 = vector.load %arg3[%c7_25, %c0_26] : memref<10x256xf32, #tpu.memory_space<vmem>>, vector<1x256xf32>
    %41 = vector.broadcast %39 : vector<1x1xf32> to vector<1x256xf32>
    %42 = arith.mulf %41, %40 : vector<1x256xf32>
    %43 = arith.addf %38, %42 : vector<1x256xf32>
    %c0_27 = arith.constant 0 : index
    %c8 = arith.constant 8 : index
    %44 = vector.load %arg6[%c0_27, %c8] : memref<1x10xf32, #tpu.memory_space<vmem>>, vector<1x1xf32>
    %c8_28 = arith.constant 8 : index
    %c0_29 = arith.constant 0 : index
    %45 = vector.load %arg3[%c8_28, %c0_29] : memref<10x256xf32, #tpu.memory_space<vmem>>, vector<1x256xf32>
    %46 = vector.broadcast %44 : vector<1x1xf32> to vector<1x256xf32>
    %47 = arith.mulf %46, %45 : vector<1x256xf32>
    %48 = arith.addf %43, %47 : vector<1x256xf32>
    %c0_30 = arith.constant 0 : index
    %c9 = arith.constant 9 : index
    %49 = vector.load %arg6[%c0_30, %c9] : memref<1x10xf32, #tpu.memory_space<vmem>>, vector<1x1xf32>
    %c9_31 = arith.constant 9 : index
    %c0_32 = arith.constant 0 : index
    %50 = vector.load %arg3[%c9_31, %c0_32] : memref<10x256xf32, #tpu.memory_space<vmem>>, vector<1x256xf32>
    %51 = vector.broadcast %49 : vector<1x1xf32> to vector<1x256xf32>
    %52 = arith.mulf %51, %50 : vector<1x256xf32>
    %53 = arith.addf %48, %52 : vector<1x256xf32>
    %c0_33 = arith.constant 0 : index
    %c0_34 = arith.constant 0 : index
    %54 = vector.load %arg7[%c0_33, %c0_34] : memref<1x1xf32, #tpu.memory_space<vmem>>, vector<1x1xf32>
    %cst = arith.constant dense<0xFF800000> : vector<1xf32>
    %55 = vector.multi_reduction <maximumf>, %53, %cst [1] : vector<1x256xf32> to vector<1xf32>
    %56 = vector.shape_cast %55 : vector<1xf32> to vector<1x1xf32>
    %57 = arith.maximumf %54, %56 : vector<1x1xf32>
    %c0_35 = arith.constant 0 : index
    %c0_36 = arith.constant 0 : index
    %58 = vector.load %arg8[%c0_35, %c0_36] : memref<1x1xf32, #tpu.memory_space<vmem>>, vector<1x1xf32>
    %59 = arith.subf %54, %57 : vector<1x1xf32>
    %60 = math.exp %59 : vector<1x1xf32>
    %61 = arith.mulf %58, %60 : vector<1x1xf32>
    %62 = vector.broadcast %57 : vector<1x1xf32> to vector<1x256xf32>
    %63 = arith.subf %53, %62 : vector<1x256xf32>
    %64 = math.exp %63 : vector<1x256xf32>
    %cst_37 = arith.constant dense<0.000000e+00> : vector<1xf32>
    %65 = vector.multi_reduction <add>, %64, %cst_37 [1] : vector<1x256xf32> to vector<1xf32>
    %66 = vector.shape_cast %65 : vector<1xf32> to vector<1x1xf32>
    %67 = arith.addf %61, %66 : vector<1x1xf32>
    %c0_38 = arith.constant 0 : index
    %c0_39 = arith.constant 0 : index
    %68 = vector.load %arg8[%c0_38, %c0_39] : memref<1x1xf32, #tpu.memory_space<vmem>>, vector<1x1xf32>
    tpu.vector_store %arg8[%c0_38, %c0_39], %67 {strides = array<i32>} : memref<1x1xf32, #tpu.memory_space<vmem>>, vector<1x1xf32>,
    %c0_40 = arith.constant 0 : index
    %c0_41 = arith.constant 0 : index
    %69 = vector.load %arg7[%c0_40, %c0_41] : memref<1x1xf32, #tpu.memory_space<vmem>>, vector<1x1xf32>
    tpu.vector_store %arg7[%c0_40, %c0_41], %57 {strides = array<i32>} : memref<1x1xf32, #tpu.memory_space<vmem>>, vector<1x1xf32>,
    %70 = arith.index_cast %arg0 : i32 to index
    %c0_42 = arith.constant 0 : index
    %c0_43 = arith.constant 0 : index
    %71 = vector.load %arg5[%70, %c0_42, %c0_43] : memref<4x1x256xf32, #tpu.memory_space<vmem>>, vector<1x1x256xf32>
    %72 = vector.shape_cast %71 : vector<1x1x256xf32> to vector<1x256xf32>
    %73 = vector.shape_cast %53 : vector<1x256xf32> to vector<1x1x256xf32>
    tpu.vector_store %arg5[%70, %c0_42, %c0_43], %73 {strides = array<i32>} : memref<4x1x256xf32, #tpu.memory_space<vmem>>, vector<1x1x256xf32>,
    %c3_i32 = arith.constant 3 : i32
    %74 = arith.cmpi eq, %arg0, %c3_i32 : i32
    %75 = arith.extui %74 : i1 to i32
    %c0_i32_44 = arith.constant 0 : i32
    %76 = arith.cmpi ne, %75, %c0_i32_44 : i32
    scf.if %76 {
      %c0_45 = arith.constant 0 : index
      %c0_46 = arith.constant 0 : index
      %77 = vector.load %arg7[%c0_45, %c0_46] : memref<1x1xf32, #tpu.memory_space<vmem>>, vector<1x1xf32>
      %c0_47 = arith.constant 0 : index
      %c0_48 = arith.constant 0 : index
      %78 = vector.load %arg8[%c0_47, %c0_48] : memref<1x1xf32, #tpu.memory_space<vmem>>, vector<1x1xf32>
      %79 = math.log %78 : vector<1x1xf32>
      %80 = arith.addf %77, %79 : vector<1x1xf32>
      %c0_49 = arith.constant 0 : index
      %c0_50 = arith.constant 0 : index
      %c0_51 = arith.constant 0 : index
      %81 = vector.load %arg5[%c0_49, %c0_50, %c0_51] : memref<4x1x256xf32, #tpu.memory_space<vmem>>, vector<4x1x256xf32>
      %82 = vector.shape_cast %80 : vector<1x1xf32> to vector<1x1x1xf32>
      %83 = vector.broadcast %82 : vector<1x1x1xf32> to vector<4x1x256xf32>
      %84 = arith.subf %81, %83 : vector<4x1x256xf32>
      %c0_52 = arith.constant 0 : index
      %c0_53 = arith.constant 0 : index
      %c0_54 = arith.constant 0 : index
      %85 = vector.load %arg5[%c0_52, %c0_53, %c0_54] : memref<4x1x256xf32, #tpu.memory_space<vmem>>, vector<4x1x256xf32>
      tpu.vector_store %arg5[%c0_52, %c0_53, %c0_54], %84 {strides = array<i32>} : memref<4x1x256xf32, #tpu.memory_space<vmem>>, vector<4x1x256xf32>,
    } else {
    }
    return
  }
  func.func @transform_1(%arg0: i32, %arg1: memref<1xi32, #tpu.memory_space<smem>>) -> (i32, i32) {
    %c0_i32 = arith.constant 0 : i32
    %c0_i32_0 = arith.constant 0 : i32
    return %c0_i32, %arg0 : i32, i32
  }
  func.func @transform_2(%arg0: i32, %arg1: memref<1xi32, #tpu.memory_space<smem>>) -> (i32, i32) {
    %c0_i32 = arith.constant 0 : i32
    %c0_i32_0 = arith.constant 0 : i32
    return %c0_i32, %arg0 : i32, i32
  }
  func.func @transform_3(%arg0: i32, %arg1: memref<1xi32, #tpu.memory_space<smem>>) -> (i32, i32, i32) {
    %c0_i32 = arith.constant 0 : i32
    %c0_i32_0 = arith.constant 0 : i32
    %c0_i32_1 = arith.constant 0 : i32
    %c0_i32_2 = arith.constant 0 : i32
    return %c0_i32, %c0_i32_0, %c0_i32_1 : i32, i32, i32
  }
}

</mosaic_0001>

<llo_original>
// kernel: skipgram_forward.1
$region0: #{skipgram_forward.1}
  #allocation0 [shape = 'u32[]', space=smem, size = 0x4, offset = 0x4, fixed_abs, tag = 'smem constant byte address 0x4 - core index']
  #allocation1 [shape = 'u32[144,128]{1,0:T(1,128)}', space=vmem, size = 0x12000, scoped, tag = 'internal scratch']
  #allocation2 [shape = 'f32[1,10]{1,0:T(1,128)}', space=vmem, size = 0x200, scoped, tag = 'scratch operand']
  #allocation3 [shape = 'f32[1,1]{1,0:T(1,128)}', space=vmem, size = 0x200, scoped, tag = 'scratch operand']
  #allocation4 [shape = 'f32[1,1]{1,0:T(1,128)}', space=vmem, size = 0x200, scoped, tag = 'scratch operand']
  #allocation5 [shape = 's32[1]{0}', space=sflag, size = 0x4, scoped, tag = 'scratch operand']
  #allocation6 [shape = 's32[1]{0}', space=sflag, size = 0x4, scoped, tag = 'scoped memory for skipgram_forward.1']
  #allocation7 [shape = 's32[1]{0:T(128)S(6)}', space=smem, size = 0x200, scoped, tag = 'prefetched SMEM operand 0']
  #allocation11 [shape = 's32[]', space=sflag, size = 0x4, offset = 0, fixed_abs, tag = 'sflag constant byte address 0x0 - dummy sync flag']
  %s0 = inlined_call_operand.<no memory space> [shape: s32[1], index: 0, kind: input, shape index: {}]
  %s1 = inlined_call_operand.vmem [shape: f32[1000,10], index: 1, kind: input, shape index: {}]
  %s2 = inlined_call_operand.vmem [shape: f32[10,1024], index: 2, kind: input, shape index: {}]
  %s3 = inlined_call_operand.vmem [shape: f32[1,1024], index: 3, kind: input, shape index: {}]
  %s4 = inlined_call_operand.hbm [shape: f32[4,1,256], index: 4, kind: output, shape index: {}]
  %s5 = sld [smem:[#allocation0]]
  $region102: #{skipgram_forward.1} parent=0
    _
  %s7 = ssub.s32 1, %s5
  %s8 = scalar_select 0, %s7, %s5
  %9 = sst [smem:[#allocation7]] %s0
  $region1: #{skipgram_forward.1} parent=0
    #allocation8 [shape = 'u8[32768]{0}', space=vmem, size = 0x8000, scoped, tag = 'input window, operand 2']
    #allocation9 [shape = 'u8[4096]{0}', space=vmem, size = 0x1000, scoped, tag = 'output window, operand 0, single buffered']
    #allocation10 [shape = 's32[2]{0}', space=sflag, size = 0x8, scoped, tag = 'scoped memory for skipgram_forward.1']
    %10 = vsyncpa [#allocation10], 0
    loop: start=0, step=1, limit=6
    $region2: #{skipgram_forward.1} parent=1 // loop_pre_header
      _
    $region3: #{skipgram_forward.1} parent=1 // loop_header
      %s12 = sphi 0, %s16
      %p13 = scmp.ge.s32.totalorder %s12, 6
      %s22 = sphi 0, %s24
      %s25 = sphi 0, %s22
      %s26 = sphi 0, %s25
      %s42 = sphi 0, %s26
      %s48 = sphi 0, %s50
      %s51 = sphi 0, %s48
      %s52 = sphi 0, %s51
      %s68 = sphi 0, %s52
      %s72 = sphi 0, %s72
      %s74 = sphi 0, %s72
      %s75 = sphi 0, %s74
      %s89 = sphi 0, %s75
    $region4: #{skipgram_forward.1} parent=1 // loop_header_branch
      %15 = sbr.rel (%p13) target = $region8
    $region5: #{skipgram_forward.1} parent=1 // loop_body
      %s17 = ssub.s32 %s12, 1
      %s18 = ssub.s32 %s12, 2
      %s19 = sadd.s32 %s12, 1
      %s20 = ssub.s32 %s12, %s19
      %p21 = scmp.eq.s32.totalorder %s20, 0
      %s23 = sadd.s32 %s22, 1
      %s24 = scalar_select %p21, %s22, %s23
      %p27 = pneg %p21
      %p28 = scmp.eq.s32.totalorder %s12, 3
      %p29 = por %p27, %p28
      %p30 = scmp.ne.s32.totalorder %s22, %s25
      %p31 = scmp.eq.s32.totalorder %s12, 0
      %p32 = por %p30, %p31
      %p33 = scmp.ne.s32.totalorder %s22, %s25
      %p34 = scmp.eq.s32.totalorder %s17, 3
      %p35 = por %p33, %p34
      %p36 = scmp.ne.s32.totalorder %s25, %s26
      %p37 = scmp.eq.s32.totalorder %s17, 0
      %p38 = por %p36, %p37
      %p39 = scmp.ne.s32.totalorder %s25, %s26
      %p40 = scmp.eq.s32.totalorder %s18, 3
      %p41 = por %p39, %p40
      %p43 = scmp.ne.s32.totalorder %s26, %s42
      %p44 = scmp.eq.s32.totalorder %s18, 0
      %p45 = por %p43, %p44
      %s46 = ssub.s32 %s12, %s19
      %p47 = scmp.eq.s32.totalorder %s46, 0
      %s49 = sadd.s32 %s48, 1
      %s50 = scalar_select %p47, %s48, %s49
      %p53 = pneg %p47
      %p54 = scmp.eq.s32.totalorder %s12, 3
      %p55 = por %p53, %p54
      %p56 = scmp.ne.s32.totalorder %s48, %s51
      %p57 = scmp.eq.s32.totalorder %s12, 0
      %p58 = por %p56, %p57
      %p59 = scmp.ne.s32.totalorder %s48, %s51
      %p60 = scmp.eq.s32.totalorder %s17, 3
      %p61 = por %p59, %p60
      %p62 = scmp.ne.s32.totalorder %s51, %s52
      %p63 = scmp.eq.s32.totalorder %s17, 0
      %p64 = por %p62, %p63
      %p65 = scmp.ne.s32.totalorder %s51, %s52
      %p66 = scmp.eq.s32.totalorder %s18, 3
      %p67 = por %p65, %p66
      %p69 = scmp.ne.s32.totalorder %s52, %s68
      %p70 = scmp.eq.s32.totalorder %s18, 0
      %p71 = por %p69, %p70
      %s73 = sadd.s32 %s72, 1
      %p76 = scmp.eq.s32.totalorder %s12, 3
      %p77 = scmp.ne.s32.totalorder %s72, %s74
      %p78 = scmp.eq.s32.totalorder %s12, 0
      %p79 = por %p77, %p78
      %p80 = scmp.ne.s32.totalorder %s72, %s74
      %p81 = scmp.eq.s32.totalorder %s17, 3
      %p82 = por %p80, %p81
      %p83 = scmp.ne.s32.totalorder %s74, %s75
      %p84 = scmp.eq.s32.totalorder %s17, 0
      %p85 = por %p83, %p84
      %p86 = scmp.ne.s32.totalorder %s74, %s75
      %p87 = scmp.eq.s32.totalorder %s18, 3
      %p88 = por %p86, %p87
      %p90 = scmp.ne.s32.totalorder %s75, %s89
      %p91 = scmp.eq.s32.totalorder %s18, 0
      %p92 = por %p90, %p91
      %p93 = scmp.le.s32.totalorder 1, %s12
      %p94 = scmp.lt.s32.totalorder %s12, 5
      %p95 = pnand %p93, %p94
      %p96 = pneg %p95
      // Predicated region
      $region9: #{skipgram_forward.1} parent=5 // pred_check
        _
      $region10: #{skipgram_forward.1} parent=5 // pred_check_branch
        %98 = sbr.rel (%p95) target = $region12
      $region11: #{skipgram_forward.1} parent=5 // pred_region
        %s99 = ssub.s32 %s12, 1
      $region12: #{skipgram_forward.1} parent=5 // pred_fallthru
        _
      %p100 = scmp.lt.s32.totalorder %s12, 4
      // Predicated region
      $region13: #{skipgram_forward.1} parent=5 // pred_check
        %p101 = pneg %p100
      $region14: #{skipgram_forward.1} parent=5 // pred_check_branch
        %103 = sbr.rel (%p101) target = $region16
      $region15: #{skipgram_forward.1} parent=5 // pred_region
        // Predicated region
        $region17: #{skipgram_forward.1} parent=15 // pred_check
          %p104 = pneg %p32
        $region18: #{skipgram_forward.1} parent=15 // pred_check_branch
          %106 = sbr.rel (%p104) target = $region20
        $region19: #{skipgram_forward.1} parent=15 // pred_region
          %s107 = sand.u32 %s22, 1
          %s108 = sand.u32 %s22, 1
          %s109 = smul.addr %s108, 32
          %s110 = scalar_lea.vmem [#allocation8], %s109
          %s111 = smul.u32 2, %s12
          %s112 = smul.addr %s111, 8
          %s113 = scalar_lea.vmem %s2, %s112
          // Predicated region
          $region21: #{skipgram_forward.1} parent=19 // pred_check
            _
          $region22: #{skipgram_forward.1} parent=19 // pred_check_branch
            %115 = sbr.rel (0) target = $region24
          $region23: #{skipgram_forward.1} parent=19 // pred_region
            // Predicated region
            $region25: #{skipgram_forward.1} parent=23 // pred_check
              _
            $region26: #{skipgram_forward.1} parent=23 // pred_check_branch
              %117 = sbr.rel (0) target = $region28
            $region27: #{skipgram_forward.1} parent=23 // pred_region
              loop: start=0, step=1, limit=1
              $region29: #{skipgram_forward.1} parent=27 // loop_pre_header
                _
              $region30: #{skipgram_forward.1} parent=27 // loop_header
                %s119 = sphi 0, %s123
                %p120 = scmp.ge.s32.totalorder %s119, 1
                %s124 = sphi %s113, %s113
                %s125 = sphi %s110, %s110
              $region31: #{skipgram_forward.1} parent=27 // loop_header_branch
                %122 = sbr.rel (%p120) target = $region35
              $region32: #{skipgram_forward.1} parent=27 // loop_body
                %v126 = vld [vmem:[%s124] sm:$0xff]
                %127 = vst [vmem:[%s125] sm:$0xff] %v126
                %v128 = vld [vmem:[%s124 + $0x8] sm:$0xff]
                %129 = vst [vmem:[%s125 + $0x8] sm:$0xff] %v128
                %v130 = vld [vmem:[%s124 + $0x40] sm:$0xff]
                %131 = vst [vmem:[%s125 + $0x10] sm:$0xff] %v130
                %v132 = vld [vmem:[%s124 + $0x48] sm:$0xff]
                %133 = vst [vmem:[%s125 + $0x18] sm:$0xff] %v132
              $region33: #{skipgram_forward.1} parent=27 // loop_footer
                %s123 = sadd.s32 1, %s119
              $region34: #{skipgram_forward.1} parent=27 // loop_footer_branch
                %118 = sbr.rel target = $region30
              $region35: #{skipgram_forward.1} parent=27 // loop_exit
                _
            $region28: #{skipgram_forward.1} parent=23 // pred_fallthru
              _
            // Predicated region
            $region36: #{skipgram_forward.1} parent=23 // pred_check
              _
            $region37: #{skipgram_forward.1} parent=23 // pred_check_branch
              %135 = sbr.rel target = $region39
            $region38: #{skipgram_forward.1} parent=23 // pred_region
              _
            $region39: #{skipgram_forward.1} parent=23 // pred_fallthru
              _
          $region24: #{skipgram_forward.1} parent=19 // pred_fallthru
            _
          %136 = vnop
        $region20: #{skipgram_forward.1} parent=15 // pred_fallthru
          _
        // Predicated region
        $region40: #{skipgram_forward.1} parent=15 // pred_check
          %p137 = pneg %p58
        $region41: #{skipgram_forward.1} parent=15 // pred_check_branch
          %139 = sbr.rel (%p137) target = $region43
        $region42: #{skipgram_forward.1} parent=15 // pred_region
          %s140 = smul.u32 2, %s12
          %p141 = scmp.lt.s32.totalorder %s140, 7
          %s142 = scalar_select %p141, %s140, 7
          %s143 = scalar_lea.vmem %s3, %s142
          %s144 = smul.u32 2, %s12
        $region43: #{skipgram_forward.1} parent=15 // pred_fallthru
          _
      $region16: #{skipgram_forward.1} parent=5 // pred_fallthru
        _
      %p145 = scmp.le.s32.totalorder 1, %s12
      %p146 = scmp.lt.s32.totalorder %s12, 5
      %p147 = pnand %p145, %p146
      %p148 = pneg %p147
      // Predicated region
      $region44: #{skipgram_forward.1} parent=5 // pred_check
        _
      $region45: #{skipgram_forward.1} parent=5 // pred_check_branch
        %150 = sbr.rel (%p147) target = $region47
      $region46: #{skipgram_forward.1} parent=5 // pred_region
        %s151 = ssub.s32 %s12, 1
        %s152 = sand.u32 %s25, 1
        %s153 = sand.u32 %s25, 1
        %s154 = smul.addr %s153, 32
        %s155 = scalar_lea.vmem [#allocation8], %s154
        // Predicated region
        $region48: #{skipgram_forward.1} parent=46 // pred_check
          %p156 = pneg %p38
        $region49: #{skipgram_forward.1} parent=46 // pred_check_branch
          %158 = sbr.rel (%p156) target = $region51
        $region50: #{skipgram_forward.1} parent=46 // pred_region
          _
        $region51: #{skipgram_forward.1} parent=46 // pred_fallthru
          _
        %s159 = sand.u32 %s25, 1
        %s160 = sand.u32 %s25, 1
        %s161 = smul.addr %s160, 32
        %s162 = scalar_lea.vmem [#allocation8], %s161
        %p163 = pneg %p38
        %p164 = pneg %p35
        %s165 = smul.u32 2, %s17
        %p166 = scmp.lt.s32.totalorder %s165, 7
        %s167 = scalar_select %p166, %s165, 7
        %s168 = scalar_lea.vmem %s3, %s167
        %p169 = pneg %p64
        %p170 = pneg %p61
        %p171 = pneg %p85
        %p172 = pneg %p82
        %s173 = smul.u32 2, %s17
        %s174 = smul.u32 2, %s17
        %p175 = scmp.lt.s32.totalorder %s174, 7
        %s176 = scalar_select %p175, %s174, 7
        %s177 = scalar_lea.vmem %s3, %s176
        %s178 = smul.u32 2, %s17
        %p179 = scmp.eq.s32.totalorder %s17, 0
        // Predicated region
        $region52: #{skipgram_forward.1} parent=46 // pred_check
          %p180 = pneg %p179
        $region53: #{skipgram_forward.1} parent=46 // pred_check_branch
          %182 = sbr.rel (%p180) target = $region55
        $region54: #{skipgram_forward.1} parent=46 // pred_region
          %s183 = sld [smem:[#allocation7]]
          %s184 = scalar_lea.vmem %s1, %s183
          %p186 = scmp.lt.u32.totalorder 1, 8
          %p187 = pneg %p186
          // Predicated region
          $region56: #{skipgram_forward.1} parent=54 // pred_check
            _
          $region57: #{skipgram_forward.1} parent=54 // pred_check_branch
            %189 = sbr.rel (%p186) target = $region59
          $region58: #{skipgram_forward.1} parent=54 // pred_region
            %s204 = sand.u32 1, 7
            %p205 = scmp.eq.s32.totalorder %s204, 0
            %p206 = pneg %p205
            // Predicated region
            $region71: #{skipgram_forward.1} parent=58 // pred_check
              _
            $region72: #{skipgram_forward.1} parent=58 // pred_check_branch
              %208 = sbr.rel (%p205) target = $region74
            $region73: #{skipgram_forward.1} parent=58 // pred_region
              %s209 = sand.u32 1, 7
              %s210 = ssub.s32 1, %s209
              %s211 = scalar_lea.vmem %s184, %s210
              %s212 = ssub.s32 1, %s209
              %s213 = scalar_lea.vmem [#allocation2], %s212
              %s214 = sshllo.u32 0, %s209
              loop: start=0, step=1, limit=1
              $region75: #{skipgram_forward.1} parent=73 // loop_pre_header
                _
              $region76: #{skipgram_forward.1} parent=73 // loop_header
                %s216 = sphi 0, %s220
                %p217 = scmp.ge.s32.totalorder %s216, 1
                %s221 = sphi %s211, %s211
                %s222 = sphi %s213, %s213
              $region77: #{skipgram_forward.1} parent=73 // loop_header_branch
                %219 = sbr.rel (%p217) target = $region81
              $region78: #{skipgram_forward.1} parent=73 // loop_body
                %v223 = vld [vmem:[%s221] sm:%s214]
                %224 = vst [vmem:[%s222] sm:%s214] %v223
              $region79: #{skipgram_forward.1} parent=73 // loop_footer
                %s220 = sadd.s32 1, %s216
              $region80: #{skipgram_forward.1} parent=73 // loop_footer_branch
                %215 = sbr.rel target = $region76
              $region81: #{skipgram_forward.1} parent=73 // loop_exit
                _
            $region74: #{skipgram_forward.1} parent=58 // pred_fallthru
              _
          $region59: #{skipgram_forward.1} parent=54 // pred_fallthru
            _
          // Predicated region
          $region60: #{skipgram_forward.1} parent=54 // pred_check
            %p190 = pneg %p186
          $region61: #{skipgram_forward.1} parent=54 // pred_check_branch
            %192 = sbr.rel (%p190) target = $region63
          $region62: #{skipgram_forward.1} parent=54 // pred_region
            %s193 = sshllo.u32 0, 1
            loop: start=0, step=1, limit=1
            $region64: #{skipgram_forward.1} parent=62 // loop_pre_header
              _
            $region65: #{skipgram_forward.1} parent=62 // loop_header
              %s195 = sphi 0, %s199
              %p196 = scmp.ge.s32.totalorder %s195, 1
              %s200 = sphi %s184, %s184
              %s201 = sphi [#allocation2], [#allocation2]
            $region66: #{skipgram_forward.1} parent=62 // loop_header_branch
              %198 = sbr.rel (%p196) target = $region70
            $region67: #{skipgram_forward.1} parent=62 // loop_body
              %v202 = vld [vmem:[%s200] sm:%s193]
              %203 = vst [vmem:[%s201] sm:%s193] %v202
            $region68: #{skipgram_forward.1} parent=62 // loop_footer
              %s199 = sadd.s32 1, %s195
            $region69: #{skipgram_forward.1} parent=62 // loop_footer_branch
              %194 = sbr.rel target = $region65
            $region70: #{skipgram_forward.1} parent=62 // loop_exit
              _
          $region63: #{skipgram_forward.1} parent=54 // pred_fallthru
            _
          // Predicated region
          $region82: #{skipgram_forward.1} parent=54 // pred_check
            _
          $region83: #{skipgram_forward.1} parent=54 // pred_check_branch
            %227 = sbr.rel (0) target = $region85
          $region84: #{skipgram_forward.1} parent=54 // pred_region
            %228 = vsyncadd [#allocation5], 16
          $region85: #{skipgram_forward.1} parent=54 // pred_fallthru
            _
          %s229 = smul.u32 1, 1
          %s230 = sshll.u32 %s229, 4
          %231 = dma.done [#allocation5], %s230
          %vm232 = vcmask 0
          %233 = vst.msk [vmem:[#allocation3] sm:$0x1] %vm232, -inf
          %234 = vst.msk [vmem:[#allocation4] sm:$0x1] %vm232, 0.0
        $region55: #{skipgram_forward.1} parent=46 // pred_fallthru
          _
        %v235 = vld [vmem:[%s177] sm:$0x3]
        %v236 = vld [vmem:[#allocation2] sm:$0x1]
        %v237 = vld [vmem:[%s155] ss:$8 sm:$0x3]
        %239 = vset.pattern.permute.xlu0 0
        %240 = vperm.xlu0 %239, %v236
        %v241 = vpop.permute.xlu0 %240
        %v243 = vlaneseq
        %v244 = vshrl.u32 %v243, 7
        %v245 = vsub.s32 0, %v244
        %v246 = vrot.slane %v241, %v245
        %v247 = vmul.f32 %v246, %v237
        %v248 = vadd.f32 %v235, %v247
        %s249 = scalar_lea.vmem %s155, 1 [#allocation8]
        %v250 = vld [vmem:[%s249] ss:$8 sm:$0x3]
        %251 = vset.pattern.permute.xlu0 1
        %252 = vperm.xlu0 %251, %v236
        %v253 = vpop.permute.xlu0 %252
        %v255 = vlaneseq
        %v256 = vshrl.u32 %v255, 7
        %v257 = vsub.s32 0, %v256
        %v258 = vrot.slane %v253, %v257
        %v259 = vmul.f32 %v258, %v250
        %v260 = vadd.f32 %v248, %v259
        %s261 = scalar_lea.vmem %s155, 2 [#allocation8]
        %v262 = vld [vmem:[%s261] ss:$8 sm:$0x3]
        %263 = vset.pattern.permute.xlu0 2
        %264 = vperm.xlu0 %263, %v236
        %v265 = vpop.permute.xlu0 %264
        %v267 = vlaneseq
        %v268 = vshrl.u32 %v267, 7
        %v269 = vsub.s32 0, %v268
        %v270 = vrot.slane %v265, %v269
        %v271 = vmul.f32 %v270, %v262
        %v272 = vadd.f32 %v260, %v271
        %s273 = scalar_lea.vmem %s155, 3 [#allocation8]
        %v274 = vld [vmem:[%s273] ss:$8 sm:$0x3]
        %275 = vset.pattern.permute.xlu0 3
        %276 = vperm.xlu0 %275, %v236
        %v277 = vpop.permute.xlu0 %276
        %v279 = vlaneseq
        %v280 = vshrl.u32 %v279, 7
        %v281 = vsub.s32 0, %v280
        %v282 = vrot.slane %v277, %v281
        %v283 = vmul.f32 %v282, %v274
        %v284 = vadd.f32 %v272, %v283
        %s285 = scalar_lea.vmem %s155, 4 [#allocation8]
        %v286 = vld [vmem:[%s285] ss:$8 sm:$0x3]
        %287 = vset.pattern.permute.xlu0 4
        %288 = vperm.xlu0 %287, %v236
        %v289 = vpop.permute.xlu0 %288
        %v291 = vlaneseq
        %v292 = vshrl.u32 %v291, 7
        %v293 = vsub.s32 0, %v292
        %v294 = vrot.slane %v289, %v293
        %v295 = vmul.f32 %v294, %v286
        %v296 = vadd.f32 %v284, %v295
        %s297 = scalar_lea.vmem %s155, 5 [#allocation8]
        %v298 = vld [vmem:[%s297] ss:$8 sm:$0x3]
        %299 = vset.pattern.permute.xlu0 5
        %300 = vperm.xlu0 %299, %v236
        %v301 = vpop.permute.xlu0 %300
        %v303 = vlaneseq
        %v304 = vshrl.u32 %v303, 7
        %v305 = vsub.s32 0, %v304
        %v306 = vrot.slane %v301, %v305
        %v307 = vmul.f32 %v306, %v298
        %v308 = vadd.f32 %v296, %v307
        %s309 = scalar_lea.vmem %s155, 6 [#allocation8]
        %v310 = vld [vmem:[%s309] ss:$8 sm:$0x3]
        %311 = vset.pattern.permute.xlu0 6
        %312 = vperm.xlu0 %311, %v236
        %v313 = vpop.permute.xlu0 %312
        %v315 = vlaneseq
        %v316 = vshrl.u32 %v315, 7
        %v317 = vsub.s32 0, %v316
        %v318 = vrot.slane %v313, %v317
        %v319 = vmul.f32 %v318, %v310
        %v320 = vadd.f32 %v308, %v319
        %s321 = scalar_lea.vmem %s155, 7 [#allocation8]
        %v322 = vld [vmem:[%s321] ss:$8 sm:$0x3]
        %323 = vset.pattern.permute.xlu0 7
        %324 = vperm.xlu0 %323, %v236
        %v325 = vpop.permute.xlu0 %324
        %v327 = vlaneseq
        %v328 = vshrl.u32 %v327, 7
        %v329 = vsub.s32 0, %v328
        %v330 = vrot.slane %v325, %v329
        %v331 = vmul.f32 %v330, %v322
        %v332 = vadd.f32 %v320, %v331
        %s333 = scalar_lea.vmem %s155, 16 [#allocation8]
        %v334 = vld [vmem:[%s333] ss:$8 sm:$0x3]
        %335 = vset.pattern.permute.xlu0 8
        %336 = vperm.xlu0 %335, %v236
        %v337 = vpop.permute.xlu0 %336
        %v339 = vlaneseq
        %v340 = vshrl.u32 %v339, 7
        %v341 = vsub.s32 0, %v340
        %v342 = vrot.slane %v337, %v341
        %v343 = vmul.f32 %v342, %v334
        %v344 = vadd.f32 %v332, %v343
        %s345 = scalar_lea.vmem %s155, 17 [#allocation8]
        %v346 = vld [vmem:[%s345] ss:$8 sm:$0x3]
        %347 = vset.pattern.permute.xlu0 9
        %348 = vperm.xlu0 %347, %v236
        %v349 = vpop.permute.xlu0 %348
        %v351 = vlaneseq
        %v352 = vshrl.u32 %v351, 7
        %v353 = vsub.s32 0, %v352
        %v354 = vrot.slane %v349, %v353
        %v355 = vmul.f32 %v354, %v346
        %v356 = vadd.f32 %v344, %v355
        %v357 = vld [vmem:[#allocation3] sm:$0x1]
        %v359 = vlaneseq
        %v360 = vshrl.u32 %v359, 7
        %v361 = vsub.s32 0, %v360
        %v362 = vrot.slane %v356, %v361
        %v363 = vlaneseq
        %v364 = vshrl.u32 %v363, 7
        %v365 = vsub.s32 1, %v364
        %v366 = vrot.slane %v356, %v365
        %vm369 = vcmask 1040384
        %v370 = vsel %vm369, %v362, -inf
        %v371 = vsel %vm369, %v366, -inf
        %v372 = vmax.f32 %v370, %v371
        %373 = vmax.xlane.f32.xlu0 %v372
        %v374 = vpop.xlane.xlu0 %373
        %v375 = vmax.f32 %v357, %v374
        %v376 = vld [vmem:[#allocation4] sm:$0x1]
        %v377 = vsub.f32 %v357, %v375
        %v378 = vmul.f32 %v377, 1.442695
        %v379 = vpow.pop %v378
        %v380 = vmul.f32 %v376, %v379
        %382 = vset.pattern.permute.xlu0 0
        %383 = vperm.xlu0 %382, %v375
        %v384 = vpop.permute.xlu0 %383
        %v386 = vlaneseq
        %v387 = vshrl.u32 %v386, 7
        %v388 = vsub.s32 0, %v387
        %v389 = vrot.slane %v384, %v388
        %v390 = vsub.f32 %v356, %v389
        %v391 = vmul.f32 %v390, 1.442695
        %v392 = vpow.pop %v391
        %v394 = vlaneseq
        %v395 = vshrl.u32 %v394, 7
        %v396 = vsub.s32 0, %v395
        %v397 = vrot.slane %v392, %v396
        %v398 = vlaneseq
        %v399 = vshrl.u32 %v398, 7
        %v400 = vsub.s32 1, %v399
        %v401 = vrot.slane %v392, %v400
        %v404 = vsel %vm369, %v397, 0.0
        %v405 = vsel %vm369, %v401, 0.0
        %v406 = vadd.f32 %v404, %v405
        %407 = vadd.xlane.f32.xlu0 %v406
        %v408 = vpop.xlane.xlu0 %407
        %v409 = vadd.f32 %v380, %v408
        %vm410 = vcmask 0
        %411 = vst.msk [vmem:[#allocation4] sm:$0x1] %vm410, %v409
        %412 = vst.msk [vmem:[#allocation3] sm:$0x1] %vm410, %v375
        %s413 = smul.u32 %s17, 2
        %s414 = scalar_lea.vmem [#allocation9], %s413
        %v415 = vlaneseq
        %vm416 = vcmp.ge.s32.totalorder %v415, 0
        %vm417 = vcmp.lt.s32.totalorder %v415, 256
        %vm418 = vmand %vm416, %vm417
        %419 = vst.msk [vmem:[%s414] sm:$0x3] %vm418, %v356
        %p420 = scmp.eq.s32.totalorder %s17, 3
        // Predicated region
        $region86: #{skipgram_forward.1} parent=46 // pred_check
          %p421 = pneg %p420
        $region87: #{skipgram_forward.1} parent=46 // pred_check_branch
          %423 = sbr.rel (%p421) target = $region89
        $region88: #{skipgram_forward.1} parent=46 // pred_region
          %v424 = vld [vmem:[#allocation3] sm:$0x1]
          %v425 = vld [vmem:[#allocation4] sm:$0x1]
          %v426 = vlog2.pop %v425
          %v427 = vmul.f32 %v426, 0.6931472
          %v428 = vadd.f32 %v424, %v427
          %v429 = vld [vmem:[#allocation9] sm:$0x3]
          %v430 = vld [vmem:[#allocation9 + $0x2] sm:$0x3]
          %v431 = vld [vmem:[#allocation9 + $0x4] sm:$0x3]
          %v432 = vld [vmem:[#allocation9 + $0x6] sm:$0x3]
          %434 = vset.pattern.permute.xlu0 0
          %435 = vperm.xlu0 %434, %v428
          %v436 = vpop.permute.xlu0 %435
          %v438 = vlaneseq
          %v439 = vshrl.u32 %v438, 7
          %v440 = vsub.s32 0, %v439
          %v441 = vrot.slane %v436, %v440
          %v442 = vsub.f32 %v429, %v441
          %v443 = vsub.f32 %v430, %v441
          %v444 = vsub.f32 %v431, %v441
          %v445 = vsub.f32 %v432, %v441
          %446 = vst.msk [vmem:[#allocation9] sm:$0x3] %vm418, %v442
          %447 = vst.msk [vmem:[#allocation9 + $0x2] sm:$0x3] %vm418, %v443
          %448 = vst.msk [vmem:[#allocation9 + $0x4] sm:$0x3] %vm418, %v444
          %449 = vst.msk [vmem:[#allocation9 + $0x6] sm:$0x3] %vm418, %v445
        $region89: #{skipgram_forward.1} parent=46 // pred_fallthru
          _
        // Predicated region
        $region90: #{skipgram_forward.1} parent=46 // pred_check
          %p450 = pneg %p82
        $region91: #{skipgram_forward.1} parent=46 // pred_check_branch
          %452 = sbr.rel (%p450) target = $region93
        $region92: #{skipgram_forward.1} parent=46 // pred_region
          %s454 = ssub.s32 128, 128
          %455 = vsyncadd [#allocation10], %s454
          %s456 = sshll.u32 [#allocation9], 4
          %s457 = int_to_ptr.vmem [resolvable:$true] %s456
          %462 = dma.vmem_to_hbm [thread:$0]  %s457, 128, %s4, [#allocation10], 32, 32, 2
        $region93: #{skipgram_forward.1} parent=46 // pred_fallthru
          _
        // Predicated region
        $region94: #{skipgram_forward.1} parent=46 // pred_check
          %p463 = pneg %p82
        $region95: #{skipgram_forward.1} parent=46 // pred_check_branch
          %465 = sbr.rel (%p463) target = $region97
        $region96: #{skipgram_forward.1} parent=46 // pred_region
          %466 = dma.done [#allocation10], 128
        $region97: #{skipgram_forward.1} parent=46 // pred_fallthru
          _
      $region47: #{skipgram_forward.1} parent=5 // pred_fallthru
        _
      %p467 = scmp.le.s32.totalorder 2, %s12
      // Predicated region
      $region98: #{skipgram_forward.1} parent=5 // pred_check
        %p468 = pneg %p467
      $region99: #{skipgram_forward.1} parent=5 // pred_check_branch
        %470 = sbr.rel (%p468) target = $region101
      $region100: #{skipgram_forward.1} parent=5 // pred_region
        %s471 = ssub.s32 %s12, 2
      $region101: #{skipgram_forward.1} parent=5 // pred_fallthru
        _
    $region6: #{skipgram_forward.1} parent=1 // loop_footer
      %s16 = sadd.s32 1, %s12
    $region7: #{skipgram_forward.1} parent=1 // loop_footer_branch
      %11 = sbr.rel target = $region3
    $region8: #{skipgram_forward.1} parent=1 // loop_exit
      _
    %472 = vsyncpa [#allocation10], 1
    %s473 = scalar_lea.sflag [#allocation10], 1
    %474 = vsyncpa %s473, 1
  %475 = vsyncmov [#allocation5]
  %s476 = vpop.sfrf %475
  %p477 = scmp.eq.s32.totalorder %s476, 0
  %p478 = pneg %p477
  %480 = shalt.err (%p478)

</llo_original>
